<compile_context>
chip_gen: v6e
topology: v6e:2x2x1
jax: 0.10.0
libtpu: 0.0.40
codegen_flags: <defaults>
</compile_context>

<pallas_src>
import jax
import jax.numpy as jnp
from jax.experimental import pallas as pl
from jax.experimental.pallas import tpu as pltpu

IN_FEATURES = 20
HIDDEN = 40
OUT_FEATURES = 1

# Per-buffer VMEM for one x tile: TILE_B rows x 128 padded lanes of f32
# => TILE_B * 512 B.  2048 rows = 1 MiB per buffer (2 MiB double-buffered),
# comfortably inside scoped VMEM on v5e/v6e (128 MiB) and v7x (64 MiB).
TILE_B_MAX = 2048


def _round_up(n, m):
    return ((n + m - 1) // m) * m


def fused_linear_kernel(x_ref, w_ref, b_ref, o_ref):
    """y = sum(x * w_row, axis=-1) + b   for one batch tile.

    x_ref: (TILE_B, 20)  VMEM, pipelined over the batch grid axis
    w_ref: (1, 20)       VMEM, constant index_map -> resident across steps
    b_ref: (1, 1)        VMEM, fused scalar bias
    o_ref: (TILE_B, 1)   VMEM
    """
    prod = x_ref[...] * w_ref[...]                 # VPU, (TILE_B, 20)
    y = jnp.sum(prod, axis=-1, keepdims=True)      # XLU reduce, (TILE_B, 1)
    o_ref[...] = (y + b_ref[...]).astype(o_ref.dtype)


@jax.jit
def my_model_forward(x, w1, b1, w2, b2):
    """MyModel forward: x (B, 20) f32 -> (B, 1) f32.

    Weights stored as (in, out): w1 (20, 40), b1 (1, 40), w2 (40, 1), b2 (1, 1);
    numerically identical to PyTorch's x @ W.T + b convention.
    """
    B = x.shape[0]

    # --- algebraic fusion of the two affine layers (tiny; done once, outside
    #     the kernel, fused by XLA into the same dispatch) ----------------
    w_eff = w1 @ w2                  # (20, 1)
    b_eff = b1 @ w2 + b2             # (1, 1)
    w_row = w_eff.T                  # (1, 20) broadcast row used in-kernel

    tile_b = min(TILE_B_MAX, _round_up(B, 8))
    grid = (pl.cdiv(B, tile_b),)

    cost = pl.CostEstimate(
        flops=2 * B * IN_FEATURES,
        transcendentals=0,
        bytes_accessed=B * IN_FEATURES * 4      # read x
        + B * OUT_FEATURES * 4                  # write y
        + IN_FEATURES * 4 + 4,                  # fused weights + bias
    )

    return pl.pallas_call(
        fused_linear_kernel,
        out_shape=jax.ShapeDtypeStruct((B, OUT_FEATURES), jnp.float32),
        grid_spec=pl.GridSpec(
            grid=grid,
            in_specs=[
                pl.BlockSpec((tile_b, IN_FEATURES), lambda i: (i, 0)),
                pl.BlockSpec((1, IN_FEATURES), lambda i: (0, 0)),
                pl.BlockSpec((1, 1), lambda i: (0, 0)),
            ],
            out_specs=pl.BlockSpec((tile_b, OUT_FEATURES), lambda i: (i, 0)),
        ),
        compiler_params=pltpu.CompilerParams(
            # independent batch tiles -> shard across both TCs on v7x
            dimension_semantics=("parallel",),
        ),
        cost_estimate=cost,
    )(x, w_row, b_eff)


def init_params(key):
    """Deterministic parameter init mimicking torch.nn.Linear.

    Linear(20, 40): weight (40, 20), bias (40,)
    Linear(40, 1):  weight (1, 40),  bias (1,)
    Stored transposed as (in, out) for the kernel; biases as (1, out).
    """
    k1, k2, k3, k4 = jax.random.split(key, 4)
    # torch default init: U(-1/sqrt(fan_in), 1/sqrt(fan_in))
    lim1 = 1.0 / (IN_FEATURES ** 0.5)
    lim2 = 1.0 / (HIDDEN ** 0.5)
    w1 = jax.random.uniform(k1, (IN_FEATURES, HIDDEN), jnp.float32, -lim1, lim1)
    b1 = jax.random.uniform(k2, (1, HIDDEN), jnp.float32, -lim1, lim1)
    w2 = jax.random.uniform(k3, (HIDDEN, OUT_FEATURES), jnp.float32, -lim2, lim2)
    b2 = jax.random.uniform(k4, (1, OUT_FEATURES), jnp.float32, -lim2, lim2)
    return w1, b1, w2, b2


if __name__ == "__main__":
    key = jax.random.PRNGKey(0)
    kx, kp = jax.random.split(key)
    w1, b1, w2, b2 = init_params(kp)

    # Small demo batch plus extra sizes exercising non-multiple-of-8 batches
    # and full-tile batches (the wrapper tiles arbitrary B).
    for B in (8, 19, 200):
        x = jax.random.normal(jax.random.fold_in(kx, B), (B, IN_FEATURES),
                              jnp.float32)
        y = jax.block_until_ready(my_model_forward(x, w1, b1, w2, b2))

        # correctness check against the un-fused two-layer reference
        ref = (x @ w1 + b1) @ w2 + b2
        assert y.shape == (B, OUT_FEATURES), y.shape
        assert jnp.allclose(y, ref, atol=1e-4, rtol=1e-4), (B, y, ref)

    print("KERNEL_OK")
</pallas_src>

<mosaic_0001>
module attributes {stable_mosaic.version = 11 : i64} {
  func.func @fused_linear_kernel(%arg0: i32, %arg1: memref<8x20xf32, #tpu.memory_space<vmem>>, %arg2: memref<1x20xf32, #tpu.memory_space<vmem>>, %arg3: memref<1x1xf32, #tpu.memory_space<vmem>>, %arg4: memref<8x1xf32, #tpu.memory_space<vmem>>) attributes {dimension_semantics = [#tpu.dimension_semantics<parallel>], iteration_bounds = array<i64: 1>, scalar_prefetch = 0 : i64, scratch_operands = 0 : i64, tpu.core_type = #tpu.core_type<tc>, window_params = [{transform_indices = @transform_0, window_bounds = array<i64: 8, 20>}, {pipeline_mode = #tpu.pipeline_mode<synchronous>, transform_indices = @transform_1, window_bounds = array<i64: 1, 20>}, {pipeline_mode = #tpu.pipeline_mode<synchronous>, transform_indices = @transform_2, window_bounds = array<i64: 1, 1>}, {transform_indices = @transform_3, window_bounds = array<i64: 8, 1>}]} {
    %c0 = arith.constant 0 : index
    %c0_0 = arith.constant 0 : index
    %0 = vector.load %arg1[%c0, %c0_0] : memref<8x20xf32, #tpu.memory_space<vmem>>, vector<8x20xf32>
    %c0_1 = arith.constant 0 : index
    %c0_2 = arith.constant 0 : index
    %1 = vector.load %arg2[%c0_1, %c0_2] : memref<1x20xf32, #tpu.memory_space<vmem>>, vector<1x20xf32>
    %2 = vector.broadcast %1 : vector<1x20xf32> to vector<8x20xf32>
    %3 = arith.mulf %0, %2 : vector<8x20xf32>
    %cst = arith.constant dense<0.000000e+00> : vector<8xf32>
    %4 = vector.multi_reduction <add>, %3, %cst [1] : vector<8x20xf32> to vector<8xf32>
    %5 = vector.shape_cast %4 : vector<8xf32> to vector<8x1xf32>
    %c0_3 = arith.constant 0 : index
    %c0_4 = arith.constant 0 : index
    %6 = vector.load %arg3[%c0_3, %c0_4] : memref<1x1xf32, #tpu.memory_space<vmem>>, vector<1x1xf32>
    %7 = vector.broadcast %6 : vector<1x1xf32> to vector<8x1xf32>
    %8 = arith.addf %5, %7 : vector<8x1xf32>
    %c0_5 = arith.constant 0 : index
    %c0_6 = arith.constant 0 : index
    %9 = vector.load %arg4[%c0_5, %c0_6] : memref<8x1xf32, #tpu.memory_space<vmem>>, vector<8x1xf32>
    tpu.vector_store %arg4[%c0_5, %c0_6], %8 {strides = array<i32>} : memref<8x1xf32, #tpu.memory_space<vmem>>, vector<8x1xf32>,
    return
  }
  func.func @transform_0(%arg0: i32) -> (i32, i32) {
    %c0_i32 = arith.constant 0 : i32
    %c0_i32_0 = arith.constant 0 : i32
    return %arg0, %c0_i32 : i32, i32
  }
  func.func @transform_1(%arg0: i32) -> (i32, i32) {
    %c0_i32 = arith.constant 0 : i32
    %c0_i32_0 = arith.constant 0 : i32
    %c0_i32_1 = arith.constant 0 : i32
    return %c0_i32, %c0_i32_0 : i32, i32
  }
  func.func @transform_2(%arg0: i32) -> (i32, i32) {
    %c0_i32 = arith.constant 0 : i32
    %c0_i32_0 = arith.constant 0 : i32
    %c0_i32_1 = arith.constant 0 : i32
    return %c0_i32, %c0_i32_0 : i32, i32
  }
  func.func @transform_3(%arg0: i32) -> (i32, i32) {
    %c0_i32 = arith.constant 0 : i32
    %c0_i32_0 = arith.constant 0 : i32
    return %arg0, %c0_i32 : i32, i32
  }
}

</mosaic_0001>

<llo_original>
// kernel: my_model_forward.1
$region0: #{my_model_forward.1}
  #allocation0 [shape = 'u32[]', space=smem, size = 0x4, offset = 0x4, fixed_abs, tag = 'smem constant byte address 0x4 - core index']
  #allocation1 [shape = 'u32[144,128]{1,0:T(1,128)}', space=vmem, size = 0x12000, scoped, tag = 'internal scratch']
  #allocation2 [shape = 'f32[1,1]{1,0:T(1,128)S(1)}', space=vmem, size = 0x200, scoped, tag = 'scoped memory for my_model_forward.1']
  %s0 = inlined_call_operand.vmem [shape: f32[8,20], index: 0, kind: input, shape index: {}]
  %s1 = inlined_call_operand.vmem [shape: f32[1,20], index: 1, kind: input, shape index: {}]
  %s2 = inlined_call_operand.<no memory space> [shape: f32[1,1], index: 2, kind: input, shape index: {}]
  %s3 = inlined_call_operand.vmem [shape: f32[8,1], index: 3, kind: output, shape index: {}]
  %s4 = sld [smem:[#allocation0]]
  $region22: #{my_model_forward.1} parent=0
    _
  %s6 = ssub.s32 1, %s4
  %s7 = scalar_select 0, %s6, %s4
  %v8 = vstv %s2
  %9 = vst [vmem:[#allocation2] sm:$0x1] %v8
  // Predicated region
  $region2: #{my_model_forward.1} parent=0 // pred_check
    _
  $region3: #{my_model_forward.1} parent=0 // pred_check_branch
    %11 = sbr.rel (0) target = $region5
  $region4: #{my_model_forward.1} parent=0 // pred_region
    _
  $region5: #{my_model_forward.1} parent=0 // pred_fallthru
    _
  // Predicated region
  $region6: #{my_model_forward.1} parent=0 // pred_check
    _
  $region7: #{my_model_forward.1} parent=0 // pred_check_branch
    %13 = sbr.rel (0) target = $region9
  $region8: #{my_model_forward.1} parent=0 // pred_region
    _
  $region9: #{my_model_forward.1} parent=0 // pred_fallthru
    _
  // Predicated region
  $region10: #{my_model_forward.1} parent=0 // pred_check
    _
  $region11: #{my_model_forward.1} parent=0 // pred_check_branch
    %15 = sbr.rel (0) target = $region13
  $region12: #{my_model_forward.1} parent=0 // pred_region
    _
  $region13: #{my_model_forward.1} parent=0 // pred_fallthru
    _
  %v16 = vld [vmem:[%s0] sm:$0xff]
  %v17 = vld [vmem:[%s1] sm:$0x1]
  %v19 = vlaneseq
  %v20 = vshrl.u32 %v19, 7
  %v21 = vsub.s32 0, %v20
  %v22 = vrot.slane %v17, %v21
  %v24 = vmul.f32 %v16, %v22
  %vm25 = vcmask 162816
  %v26 = vsel %vm25, %v24, 0.0
  %27 = vadd.xlane.f32.xlu0 %v26
  %v28 = vpop.xlane.xlu0 %27
  %v29 = vld [vmem:[#allocation2] sm:$0x1]
  %v31 = vlaneseq
  %v32 = vshrl.u32 %v31, 7
  %v33 = vsub.s32 0, %v32
  %v34 = vrot.slane %v29, %v33
  %v36 = vadd.f32 %v28, %v34
  %vm37 = vcmask 7168
  %38 = vst.msk [vmem:[%s3] sm:$0xff] %vm37, %v36
  // Predicated region
  $region14: #{my_model_forward.1} parent=0 // pred_check
    _
  $region15: #{my_model_forward.1} parent=0 // pred_check_branch
    %40 = sbr.rel (0) target = $region17
  $region16: #{my_model_forward.1} parent=0 // pred_region
    _
  $region17: #{my_model_forward.1} parent=0 // pred_fallthru
    _
  // Predicated region
  $region18: #{my_model_forward.1} parent=0 // pred_check
    _
  $region19: #{my_model_forward.1} parent=0 // pred_check_branch
    %42 = sbr.rel (0) target = $region21
  $region20: #{my_model_forward.1} parent=0 // pred_region
    _
  $region21: #{my_model_forward.1} parent=0 // pred_fallthru
    _

</llo_original>
